<compile_context>
chip_gen: v6e
topology: v6e:2x2x1
jax: 0.10.0
libtpu: 0.0.40
codegen_flags: <defaults>
</compile_context>

<pallas_src>
import functools

import jax
import jax.numpy as jnp
from jax.experimental import pallas as pl
from jax.experimental.pallas import tpu as pltpu

_NUM_CORE_SLOTS = 2   # leading "parallel" grid axis -> both TCs on v7x
_OUT_SUB = 8          # (8,128)-aligned per-core output block
_OUT_LANE = 128


def _triplet_loss_kernel(anchor_ref, pos_ref, neg_ref, w_a_ref, w_b_ref, b_ref,
                         o_ref, acc_ref, *, margin, total_b, block_b,
                         tiles_per_core):
    c = pl.program_id(0)     # core slot ("parallel")
    i = pl.program_id(1)     # tile index within this core slot ("arbitrary")

    @pl.when(i == 0)
    def _init():
        acc_ref[...] = jnp.zeros_like(acc_ref)

    a = anchor_ref[...].astype(jnp.float32)   # (TB, H) f32 math
    p = pos_ref[...].astype(jnp.float32)
    n = neg_ref[...].astype(jnp.float32)
    w_a = w_a_ref[...]                        # (1, H) f32, VMEM-resident
    w_b = w_b_ref[...]                        # (1, H) f32, VMEM-resident
    bias = b_ref[0, 0]                        # scalar (SMEM)

    # Linear(2H -> 1): cat([a, x]) @ W^T + b == sum(a*w_a) + sum(x*w_b) + b.
    # Kept on VPU/XLU — the kernel is HBM-bound, MXU would buy no throughput;
    # the f32 upcast temporaries are accounted for in the VMEM budget below.
    dot_a = jnp.sum(a * w_a, axis=-1, keepdims=True)   # (TB, 1)
    dot_p = jnp.sum(p * w_b, axis=-1, keepdims=True)   # (TB, 1)
    dot_n = jnp.sum(n * w_b, axis=-1, keepdims=True)   # (TB, 1)

    sim_p = jax.nn.sigmoid(dot_a + dot_p + bias)        # EUP
    sim_n = jax.nn.sigmoid(dot_a + dot_n + bias)
    hinge = jnp.maximum(sim_n - sim_p + margin, 0.0)    # (TB, 1)

    # Mask padded remainder rows and fully-out-of-range duplicate tiles
    # (the ragged core split clamps the block index; logical row id is not
    # clamped, so everything past the true batch contributes exactly 0).
    t = c * tiles_per_core + i
    row = t * block_b + jax.lax.broadcasted_iota(jnp.int32, (block_b, 1), 0)
    acc_ref[...] += jnp.where(row < total_b, hinge, 0.0)

    @pl.when(i == pl.num_programs(1) - 1)
    def _finalize():
        total = jnp.sum(acc_ref[...])                   # single reduce at the end
        r = jax.lax.broadcasted_iota(jnp.int32, (_OUT_SUB, _OUT_LANE), 0)
        l = jax.lax.broadcasted_iota(jnp.int32, (_OUT_SUB, _OUT_LANE), 1)
        # Per-core partial sum at [0, 0] of this core's block, zeros elsewhere,
        # so the wrapper can simply jnp.sum(out) / B.
        o_ref[...] = jnp.where((r == 0) & (l == 0), total, 0.0)


def _vmem_capacity_bytes():
    try:
        return int(pltpu.get_tpu_info().vmem_capacity_bytes)
    except Exception:
        return 64 * 1024 * 1024   # conservative fallback (v7x-sized)


def _pick_block_b(B, H, itemsize, budget_bytes, max_block_b=None):
    """Bytes-based batch tile: 3 double-buffered streams + f32 working set."""
    sub = max(8, 32 // itemsize)     # sublane granule: 8 f32, 16 bf16, 32 int8
    if B <= sub:
        return B                     # single block == full array dims
    # Per-row VMEM cost: 3 streams x 2 pipeline buffers (input dtype) plus
    # ~4 f32 tiles of in-body working set (a/p/n upcasts + one product temp).
    per_row = 3 * 2 * H * itemsize + 4 * H * 4
    tb = budget_bytes // per_row
    tb = max(sub, min(int(tb), 8192))
    if max_block_b is not None:
        tb = min(tb, max(sub, int(max_block_b)))
    tb = (tb // sub) * sub
    tb = min(tb, max(sub, (B // sub) * sub))   # never exceed the batch
    return tb


def triplet_margin_loss_multi(anchor, pos, neg, weight, bias, margin=0.25,
                              max_block_b=None):
    """anchor/pos/neg: (B, H) f32 or bf16. weight: (2H,) == Linear(2H,1).weight[0]. bias: (1,)."""
    B, H = anchor.shape
    assert weight.shape == (2 * H,)

    w_a = weight[:H].reshape(1, H).astype(jnp.float32)
    w_b = weight[H:].reshape(1, H).astype(jnp.float32)
    b = jnp.asarray(bias, jnp.float32).reshape(1, 1)

    itemsize = jnp.dtype(anchor.dtype).itemsize
    vmem_cap = _vmem_capacity_bytes()
    budget = vmem_cap // 2                    # 32 MiB on v7x, 64 MiB on v5e/v6e
    vmem_limit = (vmem_cap * 3) // 4          # 48 MiB on v7x, 96 MiB on v5e/v6e

    tb = _pick_block_b(B, H, itemsize, budget, max_block_b)
    num_blocks = pl.cdiv(B, tb)
    tiles_per_core = pl.cdiv(num_blocks, _NUM_CORE_SLOTS)

    def stream_map(c, i):
        # Clamp so the ragged core split never DMAs past the last real block;
        # the in-kernel row mask zeroes any duplicated/padded rows.
        return (jnp.minimum(c * tiles_per_core + i, num_blocks - 1), 0)

    stream_spec = pl.BlockSpec((tb, H), stream_map)
    weight_spec = pl.BlockSpec((1, H), lambda c, i: (0, 0))       # VMEM-resident
    bias_spec = pl.BlockSpec(memory_space=pltpu.MemorySpace.SMEM)

    grid_spec = pltpu.PrefetchScalarGridSpec(
        num_scalar_prefetch=0,
        grid=(_NUM_CORE_SLOTS, tiles_per_core),
        in_specs=[stream_spec, stream_spec, stream_spec,
                  weight_spec, weight_spec, bias_spec],
        out_specs=pl.BlockSpec((_OUT_SUB, _OUT_LANE), lambda c, i: (c, 0)),
        scratch_shapes=[pltpu.VMEM((tb, 1), jnp.float32)],        # per-tile hinge acc
    )

    cost = pl.CostEstimate(
        flops=6 * B * H + 16 * B,
        transcendentals=2 * B,
        bytes_accessed=3 * B * H * itemsize + 8 * H
        + _NUM_CORE_SLOTS * _OUT_SUB * _OUT_LANE * 4,
    )

    out = pl.pallas_call(
        functools.partial(_triplet_loss_kernel, margin=float(margin),
                          total_b=int(B), block_b=int(tb),
                          tiles_per_core=int(tiles_per_core)),
        out_shape=jax.ShapeDtypeStruct((_NUM_CORE_SLOTS * _OUT_SUB, _OUT_LANE),
                                       jnp.float32),
        grid_spec=grid_spec,
        compiler_params=pltpu.CompilerParams(
            dimension_semantics=("parallel", "arbitrary"),
            vmem_limit_bytes=int(vmem_limit),
        ),
        cost_estimate=cost,
    )(anchor, pos, neg, w_a, w_b, b)

    return jnp.sum(out) / float(B)


def _reference(anchor, pos, neg, weight, bias, margin=0.25):
    # Plain-JAX reference matching the PyTorch module exactly (f32 math).
    a = anchor.astype(jnp.float32)
    p = pos.astype(jnp.float32)
    n = neg.astype(jnp.float32)
    w = weight.astype(jnp.float32).reshape(-1, 1)
    b = jnp.asarray(bias, jnp.float32).reshape(1, 1)
    sim_p = jax.nn.sigmoid(jnp.concatenate([a, p], -1) @ w + b)
    sim_n = jax.nn.sigmoid(jnp.concatenate([a, n], -1) @ w + b)
    return jnp.mean(jnp.maximum(sim_n - sim_p + margin, 0.0))


if __name__ == "__main__":
    key = jax.random.PRNGKey(0)
    k_a, k_p, k_n, k_w, k_b = jax.random.split(key, 5)

    B, H = 8, 32
    anchor = jax.random.normal(k_a, (B, H), dtype=jnp.float32)
    pos = jax.random.normal(k_p, (B, H), dtype=jnp.float32)
    neg = jax.random.normal(k_n, (B, H), dtype=jnp.float32)

    # Deterministic nn.Linear(2H, 1)-style init: U(-1/sqrt(2H), 1/sqrt(2H))
    bound = 1.0 / jnp.sqrt(2.0 * H)
    weight = jax.random.uniform(k_w, (2 * H,), minval=-bound, maxval=bound,
                                dtype=jnp.float32)
    bias = jax.random.uniform(k_b, (1,), minval=-bound, maxval=bound,
                              dtype=jnp.float32)

    # 1) f32, batch == one tile (core slot 1 fully masked)
    loss = jax.block_until_ready(
        triplet_margin_loss_multi(anchor, pos, neg, weight, bias, margin=0.25))
    ref = _reference(anchor, pos, neg, weight, bias, margin=0.25)
    assert jnp.allclose(loss, ref, atol=1e-5, rtol=1e-5), (loss, ref)

    # 2) f32, ragged batch (remainder-row masking + 2 tiles split across core slots)
    B2 = 13
    anchor2 = jax.random.normal(k_a, (B2, H), dtype=jnp.float32)
    pos2 = jax.random.normal(k_p, (B2, H), dtype=jnp.float32)
    neg2 = jax.random.normal(k_n, (B2, H), dtype=jnp.float32)
    loss2 = jax.block_until_ready(
        triplet_margin_loss_multi(anchor2, pos2, neg2, weight, bias, margin=0.25))
    ref2 = _reference(anchor2, pos2, neg2, weight, bias, margin=0.25)
    assert jnp.allclose(loss2, ref2, atol=1e-5, rtol=1e-5), (loss2, ref2)

    # 3) bf16 inputs streamed as-is (f32 math inside the kernel)
    loss3 = jax.block_until_ready(triplet_margin_loss_multi(
        anchor.astype(jnp.bfloat16), pos.astype(jnp.bfloat16),
        neg.astype(jnp.bfloat16), weight, bias, margin=0.25))
    ref3 = _reference(anchor.astype(jnp.bfloat16), pos.astype(jnp.bfloat16),
                      neg.astype(jnp.bfloat16), weight, bias, margin=0.25)
    assert jnp.allclose(loss3, ref3, atol=1e-4, rtol=1e-4), (loss3, ref3)

    # 4) Forced small tile: multi-step inner loop per core slot + clamped
    #    duplicate tiles on the ragged core split (exercises the full grid path).
    B4 = 50
    anchor4 = jax.random.normal(k_a, (B4, H), dtype=jnp.float32)
    pos4 = jax.random.normal(k_p, (B4, H), dtype=jnp.float32)
    neg4 = jax.random.normal(k_n, (B4, H), dtype=jnp.float32)
    loss4 = jax.block_until_ready(triplet_margin_loss_multi(
        anchor4, pos4, neg4, weight, bias, margin=0.25, max_block_b=8))
    ref4 = _reference(anchor4, pos4, neg4, weight, bias, margin=0.25)
    assert jnp.allclose(loss4, ref4, atol=1e-5, rtol=1e-5), (loss4, ref4)

    print("KERNEL_OK")
</pallas_src>

<mosaic_0001>
module attributes {stable_mosaic.version = 11 : i64} {
  func.func @_triplet_loss_kernel(%arg0: i32, %arg1: i32, %arg2: memref<8x32xf32, #tpu.memory_space<vmem>>, %arg3: memref<8x32xf32, #tpu.memory_space<vmem>>, %arg4: memref<8x32xf32, #tpu.memory_space<vmem>>, %arg5: memref<1x32xf32, #tpu.memory_space<vmem>>, %arg6: memref<1x32xf32, #tpu.memory_space<vmem>>, %arg7: memref<1x1xf32, #tpu.memory_space<smem>>, %arg8: memref<8x128xf32, #tpu.memory_space<vmem>>, %arg9: memref<8x1xf32, #tpu.memory_space<vmem>>) attributes {dimension_semantics = [#tpu.dimension_semantics<parallel>, #tpu.dimension_semantics<arbitrary>], iteration_bounds = array<i64: 2, 1>, scalar_prefetch = 0 : i64, scratch_operands = 1 : i64, tpu.core_type = #tpu.core_type<tc>, window_params = [{transform_indices = @transform_0, window_bounds = array<i64: 8, 32>}, {transform_indices = @transform_1, window_bounds = array<i64: 8, 32>}, {transform_indices = @transform_2, window_bounds = array<i64: 8, 32>}, {pipeline_mode = #tpu.pipeline_mode<synchronous>, transform_indices = @transform_3, window_bounds = array<i64: 1, 32>}, {pipeline_mode = #tpu.pipeline_mode<synchronous>, transform_indices = @transform_4, window_bounds = array<i64: 1, 32>}, {transform_indices = @transform_5, window_bounds = array<i64: 1, 1>}, {transform_indices = @transform_6, window_bounds = array<i64: 8, 128>}]} {
    %c0_i32 = arith.constant 0 : i32
    %0 = arith.cmpi eq, %arg1, %c0_i32 : i32
    %1 = arith.extui %0 : i1 to i32
    %c0_i32_0 = arith.constant 0 : i32
    %2 = arith.cmpi ne, %1, %c0_i32_0 : i32
    scf.if %2 {
      %cst_26 = arith.constant 0.000000e+00 : f32
      %58 = vector.broadcast %cst_26 : f32 to vector<8x1xf32>
      %c0_27 = arith.constant 0 : index
      %c0_28 = arith.constant 0 : index
      %59 = vector.load %arg9[%c0_27, %c0_28] : memref<8x1xf32, #tpu.memory_space<vmem>>, vector<8x1xf32>
      tpu.vector_store %arg9[%c0_27, %c0_28], %58 {strides = array<i32>} : memref<8x1xf32, #tpu.memory_space<vmem>>, vector<8x1xf32>,
    } else {
    }
    %c0 = arith.constant 0 : index
    %c0_1 = arith.constant 0 : index
    %3 = vector.load %arg2[%c0, %c0_1] : memref<8x32xf32, #tpu.memory_space<vmem>>, vector<8x32xf32>
    %c0_2 = arith.constant 0 : index
    %c0_3 = arith.constant 0 : index
    %4 = vector.load %arg3[%c0_2, %c0_3] : memref<8x32xf32, #tpu.memory_space<vmem>>, vector<8x32xf32>
    %c0_4 = arith.constant 0 : index
    %c0_5 = arith.constant 0 : index
    %5 = vector.load %arg4[%c0_4, %c0_5] : memref<8x32xf32, #tpu.memory_space<vmem>>, vector<8x32xf32>
    %c0_6 = arith.constant 0 : index
    %c0_7 = arith.constant 0 : index
    %6 = vector.load %arg5[%c0_6, %c0_7] : memref<1x32xf32, #tpu.memory_space<vmem>>, vector<1x32xf32>
    %c0_8 = arith.constant 0 : index
    %c0_9 = arith.constant 0 : index
    %7 = vector.load %arg6[%c0_8, %c0_9] : memref<1x32xf32, #tpu.memory_space<vmem>>, vector<1x32xf32>
    %c0_10 = arith.constant 0 : index
    %c0_11 = arith.constant 0 : index
    %8 = memref.load %arg7[%c0_10, %c0_11] : memref<1x1xf32, #tpu.memory_space<smem>>
    %9 = vector.broadcast %6 : vector<1x32xf32> to vector<8x32xf32>
    %10 = arith.mulf %3, %9 : vector<8x32xf32>
    %cst = arith.constant dense<0.000000e+00> : vector<8xf32>
    %11 = vector.multi_reduction <add>, %10, %cst [1] : vector<8x32xf32> to vector<8xf32>
    %12 = vector.shape_cast %11 : vector<8xf32> to vector<8x1xf32>
    %13 = vector.broadcast %7 : vector<1x32xf32> to vector<8x32xf32>
    %14 = arith.mulf %4, %13 : vector<8x32xf32>
    %cst_12 = arith.constant dense<0.000000e+00> : vector<8xf32>
    %15 = vector.multi_reduction <add>, %14, %cst_12 [1] : vector<8x32xf32> to vector<8xf32>
    %16 = vector.shape_cast %15 : vector<8xf32> to vector<8x1xf32>
    %17 = vector.broadcast %7 : vector<1x32xf32> to vector<8x32xf32>
    %18 = arith.mulf %5, %17 : vector<8x32xf32>
    %cst_13 = arith.constant dense<0.000000e+00> : vector<8xf32>
    %19 = vector.multi_reduction <add>, %18, %cst_13 [1] : vector<8x32xf32> to vector<8xf32>
    %20 = vector.shape_cast %19 : vector<8xf32> to vector<8x1xf32>
    %21 = arith.addf %12, %16 : vector<8x1xf32>
    %22 = vector.broadcast %8 : f32 to vector<8x1xf32>
    %23 = arith.addf %21, %22 : vector<8x1xf32>
    %24 = arith.negf %23 : vector<8x1xf32>
    %25 = math.exp %24 : vector<8x1xf32>
    %cst_14 = arith.constant 1.000000e+00 : f32
    %26 = vector.broadcast %cst_14 : f32 to vector<8x1xf32>
    %27 = arith.addf %26, %25 : vector<8x1xf32>
    %28 = arith.divf %26, %27 : vector<8x1xf32>
    %29 = arith.addf %12, %20 : vector<8x1xf32>
    %30 = vector.broadcast %8 : f32 to vector<8x1xf32>
    %31 = arith.addf %29, %30 : vector<8x1xf32>
    %32 = arith.negf %31 : vector<8x1xf32>
    %33 = math.exp %32 : vector<8x1xf32>
    %cst_15 = arith.constant 1.000000e+00 : f32
    %34 = vector.broadcast %cst_15 : f32 to vector<8x1xf32>
    %35 = arith.addf %34, %33 : vector<8x1xf32>
    %36 = arith.divf %34, %35 : vector<8x1xf32>
    %37 = arith.subf %36, %28 : vector<8x1xf32>
    %cst_16 = arith.constant 2.500000e-01 : f32
    %38 = vector.broadcast %cst_16 : f32 to vector<8x1xf32>
    %39 = arith.addf %37, %38 : vector<8x1xf32>
    %cst_17 = arith.constant 0.000000e+00 : f32
    %40 = vector.broadcast %cst_17 : f32 to vector<8x1xf32>
    %41 = arith.maximumf %39, %40 : vector<8x1xf32>
    %c1_i32 = arith.constant 1 : i32
    %42 = arith.muli %arg0, %c1_i32 : i32
    %43 = arith.addi %42, %arg1 : i32
    %c8_i32 = arith.constant 8 : i32
    %44 = arith.muli %43, %c8_i32 : i32
    %45 = tpu.iota {dimensions = array<i32: 0>} : vector<8x1xi32>
    %46 = vector.broadcast %44 : i32 to vector<8x1xi32>
    %47 = arith.addi %46, %45 : vector<8x1xi32>
    %c0_18 = arith.constant 0 : index
    %c0_19 = arith.constant 0 : index
    %48 = vector.load %arg9[%c0_18, %c0_19] : memref<8x1xf32, #tpu.memory_space<vmem>>, vector<8x1xf32>
    %c8_i32_20 = arith.constant 8 : i32
    %49 = vector.broadcast %c8_i32_20 : i32 to vector<8x1xi32>
    %50 = arith.cmpi slt, %47, %49 : vector<8x1xi32>
    %cst_21 = arith.constant 0.000000e+00 : f32
    %51 = vector.broadcast %cst_21 : f32 to vector<8x1xf32>
    %52 = arith.select %50, %41, %51 : vector<8x1xi1>, vector<8x1xf32>
    %53 = arith.addf %48, %52 : vector<8x1xf32>
    %c0_22 = arith.constant 0 : index
    %c0_23 = arith.constant 0 : index
    %54 = vector.load %arg9[%c0_22, %c0_23] : memref<8x1xf32, #tpu.memory_space<vmem>>, vector<8x1xf32>
    tpu.vector_store %arg9[%c0_22, %c0_23], %53 {strides = array<i32>} : memref<8x1xf32, #tpu.memory_space<vmem>>, vector<8x1xf32>,
    %c0_i32_24 = arith.constant 0 : i32
    %55 = arith.cmpi eq, %arg1, %c0_i32_24 : i32
    %56 = arith.extui %55 : i1 to i32
    %c0_i32_25 = arith.constant 0 : i32
    %57 = arith.cmpi ne, %56, %c0_i32_25 : i32
    scf.if %57 {
      %c0_26 = arith.constant 0 : index
      %c0_27 = arith.constant 0 : index
      %58 = vector.load %arg9[%c0_26, %c0_27] : memref<8x1xf32, #tpu.memory_space<vmem>>, vector<8x1xf32>
      %59 = vector.shape_cast %58 : vector<8x1xf32> to vector<1x8x1xf32>
      %cst_28 = arith.constant dense<0.000000e+00> : vector<1xf32>
      %60 = vector.multi_reduction <add>, %59, %cst_28 [1, 2] : vector<1x8x1xf32> to vector<1xf32>
      %61 = vector.shape_cast %60 : vector<1xf32> to vector<1x1x1xf32>
      %62 = vector.extract %61[0, 0, 0] : f32 from vector<1x1x1xf32>
      %63 = tpu.iota {dimensions = array<i32: 0>} : vector<8x128xi32>
      %64 = tpu.iota {dimensions = array<i32: 1>} : vector<8x128xi32>
      %c0_i32_29 = arith.constant 0 : i32
      %65 = vector.broadcast %c0_i32_29 : i32 to vector<8x128xi32>
      %66 = arith.cmpi eq, %63, %65 : vector<8x128xi32>
      %c0_i32_30 = arith.constant 0 : i32
      %67 = vector.broadcast %c0_i32_30 : i32 to vector<8x128xi32>
      %68 = arith.cmpi eq, %64, %67 : vector<8x128xi32>
      %69 = arith.andi %66, %68 : vector<8x128xi1>
      %cst_31 = arith.constant 0.000000e+00 : f32
      %70 = vector.broadcast %62 : f32 to vector<8x128xf32>
      %71 = vector.broadcast %cst_31 : f32 to vector<8x128xf32>
      %72 = arith.select %69, %70, %71 : vector<8x128xi1>, vector<8x128xf32>
      %c0_32 = arith.constant 0 : index
      %c0_33 = arith.constant 0 : index
      %73 = vector.load %arg8[%c0_32, %c0_33] : memref<8x128xf32, #tpu.memory_space<vmem>>, vector<8x128xf32>
      tpu.vector_store %arg8[%c0_32, %c0_33], %72 {strides = array<i32>} : memref<8x128xf32, #tpu.memory_space<vmem>>, vector<8x128xf32>,
    } else {
    }
    return
  }
  func.func @transform_0(%arg0: i32, %arg1: i32) -> (i32, i32) {
    %c1_i32 = arith.constant 1 : i32
    %0 = arith.muli %arg0, %c1_i32 : i32
    %1 = arith.addi %0, %arg1 : i32
    %c0_i32 = arith.constant 0 : i32
    %2 = arith.minsi %1, %c0_i32 : i32
    %c0_i32_0 = arith.constant 0 : i32
    %c0_i32_1 = arith.constant 0 : i32
    return %2, %c0_i32_0 : i32, i32
  }
  func.func @transform_1(%arg0: i32, %arg1: i32) -> (i32, i32) {
    %c1_i32 = arith.constant 1 : i32
    %0 = arith.muli %arg0, %c1_i32 : i32
    %1 = arith.addi %0, %arg1 : i32
    %c0_i32 = arith.constant 0 : i32
    %2 = arith.minsi %1, %c0_i32 : i32
    %c0_i32_0 = arith.constant 0 : i32
    %c0_i32_1 = arith.constant 0 : i32
    return %2, %c0_i32_0 : i32, i32
  }
  func.func @transform_2(%arg0: i32, %arg1: i32) -> (i32, i32) {
    %c1_i32 = arith.constant 1 : i32
    %0 = arith.muli %arg0, %c1_i32 : i32
    %1 = arith.addi %0, %arg1 : i32
    %c0_i32 = arith.constant 0 : i32
    %2 = arith.minsi %1, %c0_i32 : i32
    %c0_i32_0 = arith.constant 0 : i32
    %c0_i32_1 = arith.constant 0 : i32
    return %2, %c0_i32_0 : i32, i32
  }
  func.func @transform_3(%arg0: i32, %arg1: i32) -> (i32, i32) {
    %c0_i32 = arith.constant 0 : i32
    %c0_i32_0 = arith.constant 0 : i32
    %c0_i32_1 = arith.constant 0 : i32
    return %c0_i32, %c0_i32_0 : i32, i32
  }
  func.func @transform_4(%arg0: i32, %arg1: i32) -> (i32, i32) {
    %c0_i32 = arith.constant 0 : i32
    %c0_i32_0 = arith.constant 0 : i32
    %c0_i32_1 = arith.constant 0 : i32
    return %c0_i32, %c0_i32_0 : i32, i32
  }
  func.func @transform_5(%arg0: i32, %arg1: i32) -> (i32, i32) {
    %c0_i32 = arith.constant 0 : i32
    %c0_i32_0 = arith.constant 0 : i32
    %c0_i32_1 = arith.constant 0 : i32
    return %c0_i32, %c0_i32_0 : i32, i32
  }
  func.func @transform_6(%arg0: i32, %arg1: i32) -> (i32, i32) {
    %c0_i32 = arith.constant 0 : i32
    %c0_i32_0 = arith.constant 0 : i32
    return %arg0, %c0_i32 : i32, i32
  }
}

</mosaic_0001>

<llo_original>
// kernel: tpu_custom_call.1
$region0: #{tpu_custom_call.1}
  #allocation0 [shape = 'u32[]', space=smem, size = 0x4, offset = 0x4, fixed_abs, tag = 'smem constant byte address 0x4 - core index']
  #allocation1 [shape = 'u32[144,128]{1,0:T(1,128)}', space=vmem, size = 0x12000, scoped, tag = 'internal scratch']
  #allocation2 [shape = 'f32[8,1]{1,0:T(8,128)}', space=vmem, size = 0x1000, scoped, tag = 'scratch operand']
  #allocation3 [shape = 'f32[1,1]{1,0:T(1,128)S(6)}', space=smem, size = 0x200, scoped, tag = 'scoped memory for tpu_custom_call.1']
  %s0 = inlined_call_operand.hbm [shape: f32[8,32], index: 0, kind: input, shape index: {}]
  %s1 = inlined_call_operand.hbm [shape: f32[8,32], index: 1, kind: input, shape index: {}]
  %s2 = inlined_call_operand.hbm [shape: f32[8,32], index: 2, kind: input, shape index: {}]
  %s3 = inlined_call_operand.vmem [shape: f32[1,32], index: 3, kind: input, shape index: {}]
  %s4 = inlined_call_operand.vmem [shape: f32[1,32], index: 4, kind: input, shape index: {}]
  %s5 = inlined_call_operand.<no memory space> [shape: f32[1,1], index: 5, kind: input, shape index: {}]
  %s6 = inlined_call_operand.hbm [shape: f32[16,128], index: 6, kind: output, shape index: {}]
  %s7 = sld [smem:[#allocation0]]
  $region77: #{tpu_custom_call.1} parent=0
    _
  %s9 = ssub.s32 1, %s7
  %s10 = scalar_select 0, %s9, %s7
  %11 = sst [smem:[#allocation3]] %s5
  $region1: #{tpu_custom_call.1} parent=0
    #allocation4 [shape = 'u8[8192]{0}', space=vmem, size = 0x2000, scoped, tag = 'input window, operand 0']
    #allocation5 [shape = 's32[2]{0}', space=sflag, size = 0x8, scoped, tag = 'scoped memory for tpu_custom_call.1']
    #allocation6 [shape = 's32[2]{0}', space=sflag, size = 0x8, scoped, tag = 'scoped memory for tpu_custom_call.1']
    #allocation7 [shape = 'u8[8192]{0}', space=vmem, size = 0x2000, scoped, tag = 'input window, operand 1']
    #allocation8 [shape = 's32[2]{0}', space=sflag, size = 0x8, scoped, tag = 'scoped memory for tpu_custom_call.1']
    #allocation9 [shape = 'u8[8192]{0}', space=vmem, size = 0x2000, scoped, tag = 'input window, operand 2']
    #allocation10 [shape = 'u8[8192]{0}', space=vmem, size = 0x2000, scoped, tag = 'output window, operand 0']
    %12 = vsyncpa [#allocation5], 0
    %s13 = scalar_lea.sflag [#allocation5], 1
    %14 = vsyncpa %s13, 0
    %15 = vsyncpa [#allocation8], 0
    %s16 = scalar_lea.sflag [#allocation8], 1
    %17 = vsyncpa %s16, 0
    %18 = vsyncpa [#allocation6], 0
    %s19 = scalar_lea.sflag [#allocation6], 1
    %20 = vsyncpa %s19, 0
    loop: start=0, step=1, limit=4
    $region2: #{tpu_custom_call.1} parent=1 // loop_pre_header
      _
    $region3: #{tpu_custom_call.1} parent=1 // loop_header
      %s22 = sphi 0, %s26
      %p23 = scmp.ge.s32.totalorder %s22, 4
      %s29 = sphi 0, %s41
      %s30 = sphi 0, %s37
      %s31 = sphi 0, %s29
      %s32 = sphi 0, %s30
      %s33 = sphi 0, %s31
      %s34 = sphi 0, %s32
      %s50 = sphi 0, %s52
      %s53 = sphi 0, %s50
      %s54 = sphi 0, %s53
      %s70 = sphi 0, %s54
      %s82 = sphi 0, %s84
      %s85 = sphi 0, %s82
      %s86 = sphi 0, %s85
      %s102 = sphi 0, %s86
      %s114 = sphi 0, %s116
      %s117 = sphi 0, %s114
      %s118 = sphi 0, %s117
      %s134 = sphi 0, %s118
      %s138 = sphi 0, %s138
      %s140 = sphi 0, %s138
      %s141 = sphi 0, %s140
      %s155 = sphi 0, %s141
      %s159 = sphi 0, %s159
      %s161 = sphi 0, %s159
      %s162 = sphi 0, %s161
      %s176 = sphi 0, %s162
      %s180 = sphi 0, %s180
      %s182 = sphi 0, %s180
      %s183 = sphi 0, %s182
      %s197 = sphi 0, %s183
      %s203 = sphi 0, %s205
      %s206 = sphi 0, %s203
      %s207 = sphi 0, %s206
      %s223 = sphi 0, %s207
    $region4: #{tpu_custom_call.1} parent=1 // loop_header_branch
      %25 = sbr.rel (%p23) target = $region8
    $region5: #{tpu_custom_call.1} parent=1 // loop_body
      %s27 = ssub.s32 %s22, 1
      %s28 = ssub.s32 %s22, 2
      %s35 = sadd.s32 1, %s30
      %p36 = scmp.ge.s32.totalorder %s35, 1
      %s37 = scalar_select %p36, 0, %s35
      %s38 = sadd.s32 1, %s29
      %s39 = scalar_select %p36, %s38, %s29
      %p40 = scmp.ge.s32.totalorder %s39, 2
      %s41 = scalar_select %p40, 0, %s39
      %s42 = sadd.s32 %s29, %s30
      %p43 = scmp.lt.s32.totalorder %s42, 0
      %s44 = scalar_select %p43, %s42, 0
      %s45 = sadd.s32 %s41, %s37
      %p46 = scmp.lt.s32.totalorder %s45, 0
      %s47 = scalar_select %p46, %s45, 0
      %s48 = ssub.s32 %s44, %s47
      %p49 = scmp.eq.s32.totalorder %s48, 0
      %s51 = sadd.s32 %s50, 1
      %s52 = scalar_select %p49, %s50, %s51
      %p55 = pneg %p49
      %p56 = scmp.eq.s32.totalorder %s22, 1
      %p57 = por %p55, %p56
      %p58 = scmp.ne.s32.totalorder %s50, %s53
      %p59 = scmp.eq.s32.totalorder %s22, 0
      %p60 = por %p58, %p59
      %p61 = scmp.ne.s32.totalorder %s50, %s53
      %p62 = scmp.eq.s32.totalorder %s27, 1
      %p63 = por %p61, %p62
      %p64 = scmp.ne.s32.totalorder %s53, %s54
      %p65 = scmp.eq.s32.totalorder %s27, 0
      %p66 = por %p64, %p65
      %p67 = scmp.ne.s32.totalorder %s53, %s54
      %p68 = scmp.eq.s32.totalorder %s28, 1
      %p69 = por %p67, %p68
      %p71 = scmp.ne.s32.totalorder %s54, %s70
      %p72 = scmp.eq.s32.totalorder %s28, 0
      %p73 = por %p71, %p72
      %s74 = sadd.s32 %s29, %s30
      %p75 = scmp.lt.s32.totalorder %s74, 0
      %s76 = scalar_select %p75, %s74, 0
      %s77 = sadd.s32 %s41, %s37
      %p78 = scmp.lt.s32.totalorder %s77, 0
      %s79 = scalar_select %p78, %s77, 0
      %s80 = ssub.s32 %s76, %s79
      %p81 = scmp.eq.s32.totalorder %s80, 0
      %s83 = sadd.s32 %s82, 1
      %s84 = scalar_select %p81, %s82, %s83
      %p87 = pneg %p81
      %p88 = scmp.eq.s32.totalorder %s22, 1
      %p89 = por %p87, %p88
      %p90 = scmp.ne.s32.totalorder %s82, %s85
      %p91 = scmp.eq.s32.totalorder %s22, 0
      %p92 = por %p90, %p91
      %p93 = scmp.ne.s32.totalorder %s82, %s85
      %p94 = scmp.eq.s32.totalorder %s27, 1
      %p95 = por %p93, %p94
      %p96 = scmp.ne.s32.totalorder %s85, %s86
      %p97 = scmp.eq.s32.totalorder %s27, 0
      %p98 = por %p96, %p97
      %p99 = scmp.ne.s32.totalorder %s85, %s86
      %p100 = scmp.eq.s32.totalorder %s28, 1
      %p101 = por %p99, %p100
      %p103 = scmp.ne.s32.totalorder %s86, %s102
      %p104 = scmp.eq.s32.totalorder %s28, 0
      %p105 = por %p103, %p104
      %s106 = sadd.s32 %s29, %s30
      %p107 = scmp.lt.s32.totalorder %s106, 0
      %s108 = scalar_select %p107, %s106, 0
      %s109 = sadd.s32 %s41, %s37
      %p110 = scmp.lt.s32.totalorder %s109, 0
      %s111 = scalar_select %p110, %s109, 0
      %s112 = ssub.s32 %s108, %s111
      %p113 = scmp.eq.s32.totalorder %s112, 0
      %s115 = sadd.s32 %s114, 1
      %s116 = scalar_select %p113, %s114, %s115
      %p119 = pneg %p113
      %p120 = scmp.eq.s32.totalorder %s22, 1
      %p121 = por %p119, %p120
      %p122 = scmp.ne.s32.totalorder %s114, %s117
      %p123 = scmp.eq.s32.totalorder %s22, 0
      %p124 = por %p122, %p123
      %p125 = scmp.ne.s32.totalorder %s114, %s117
      %p126 = scmp.eq.s32.totalorder %s27, 1
      %p127 = por %p125, %p126
      %p128 = scmp.ne.s32.totalorder %s117, %s118
      %p129 = scmp.eq.s32.totalorder %s27, 0
      %p130 = por %p128, %p129
      %p131 = scmp.ne.s32.totalorder %s117, %s118
      %p132 = scmp.eq.s32.totalorder %s28, 1
      %p133 = por %p131, %p132
      %p135 = scmp.ne.s32.totalorder %s118, %s134
      %p136 = scmp.eq.s32.totalorder %s28, 0
      %p137 = por %p135, %p136
      %s139 = sadd.s32 %s138, 1
      %p142 = scmp.eq.s32.totalorder %s22, 1
      %p143 = scmp.ne.s32.totalorder %s138, %s140
      %p144 = scmp.eq.s32.totalorder %s22, 0
      %p145 = por %p143, %p144
      %p146 = scmp.ne.s32.totalorder %s138, %s140
      %p147 = scmp.eq.s32.totalorder %s27, 1
      %p148 = por %p146, %p147
      %p149 = scmp.ne.s32.totalorder %s140, %s141
      %p150 = scmp.eq.s32.totalorder %s27, 0
      %p151 = por %p149, %p150
      %p152 = scmp.ne.s32.totalorder %s140, %s141
      %p153 = scmp.eq.s32.totalorder %s28, 1
      %p154 = por %p152, %p153
      %p156 = scmp.ne.s32.totalorder %s141, %s155
      %p157 = scmp.eq.s32.totalorder %s28, 0
      %p158 = por %p156, %p157
      %s160 = sadd.s32 %s159, 1
      %p163 = scmp.eq.s32.totalorder %s22, 1
      %p164 = scmp.ne.s32.totalorder %s159, %s161
      %p165 = scmp.eq.s32.totalorder %s22, 0
      %p166 = por %p164, %p165
      %p167 = scmp.ne.s32.totalorder %s159, %s161
      %p168 = scmp.eq.s32.totalorder %s27, 1
      %p169 = por %p167, %p168
      %p170 = scmp.ne.s32.totalorder %s161, %s162
      %p171 = scmp.eq.s32.totalorder %s27, 0
      %p172 = por %p170, %p171
      %p173 = scmp.ne.s32.totalorder %s161, %s162
      %p174 = scmp.eq.s32.totalorder %s28, 1
      %p175 = por %p173, %p174
      %p177 = scmp.ne.s32.totalorder %s162, %s176
      %p178 = scmp.eq.s32.totalorder %s28, 0
      %p179 = por %p177, %p178
      %s181 = sadd.s32 %s180, 1
      %p184 = scmp.eq.s32.totalorder %s22, 1
      %p185 = scmp.ne.s32.totalorder %s180, %s182
      %p186 = scmp.eq.s32.totalorder %s22, 0
      %p187 = por %p185, %p186
      %p188 = scmp.ne.s32.totalorder %s180, %s182
      %p189 = scmp.eq.s32.totalorder %s27, 1
      %p190 = por %p188, %p189
      %p191 = scmp.ne.s32.totalorder %s182, %s183
      %p192 = scmp.eq.s32.totalorder %s27, 0
      %p193 = por %p191, %p192
      %p194 = scmp.ne.s32.totalorder %s182, %s183
      %p195 = scmp.eq.s32.totalorder %s28, 1
      %p196 = por %p194, %p195
      %p198 = scmp.ne.s32.totalorder %s183, %s197
      %p199 = scmp.eq.s32.totalorder %s28, 0
      %p200 = por %p198, %p199
      %s201 = ssub.s32 %s29, %s41
      %p202 = scmp.eq.s32.totalorder %s201, 0
      %s204 = sadd.s32 %s203, 1
      %s205 = scalar_select %p202, %s203, %s204
      %p208 = pneg %p202
      %p209 = scmp.eq.s32.totalorder %s22, 1
      %p210 = por %p208, %p209
      %p211 = scmp.ne.s32.totalorder %s203, %s206
      %p212 = scmp.eq.s32.totalorder %s22, 0
      %p213 = por %p211, %p212
      %p214 = scmp.ne.s32.totalorder %s203, %s206
      %p215 = scmp.eq.s32.totalorder %s27, 1
      %p216 = por %p214, %p215
      %p217 = scmp.ne.s32.totalorder %s206, %s207
      %p218 = scmp.eq.s32.totalorder %s27, 0
      %p219 = por %p217, %p218
      %p220 = scmp.ne.s32.totalorder %s206, %s207
      %p221 = scmp.eq.s32.totalorder %s28, 1
      %p222 = por %p220, %p221
      %p224 = scmp.ne.s32.totalorder %s207, %s223
      %p225 = scmp.eq.s32.totalorder %s28, 0
      %p226 = por %p224, %p225
      %p227 = scmp.le.s32.totalorder 1, %s22
      %p228 = scmp.lt.s32.totalorder %s22, 3
      %p229 = pnand %p227, %p228
      %p230 = pneg %p229
      // Predicated region
      $region9: #{tpu_custom_call.1} parent=5 // pred_check
        _
      $region10: #{tpu_custom_call.1} parent=5 // pred_check_branch
        %232 = sbr.rel (%p229) target = $region12
      $region11: #{tpu_custom_call.1} parent=5 // pred_region
        %s233 = ssub.s32 %s22, 1
        // Predicated region
        $region13: #{tpu_custom_call.1} parent=11 // pred_check
          %p234 = pneg %p151
        $region14: #{tpu_custom_call.1} parent=11 // pred_check_branch
          %236 = sbr.rel (%p234) target = $region16
        $region15: #{tpu_custom_call.1} parent=11 // pred_region
          _
        $region16: #{tpu_custom_call.1} parent=11 // pred_fallthru
          _
        // Predicated region
        $region17: #{tpu_custom_call.1} parent=11 // pred_check
          %p237 = pneg %p172
        $region18: #{tpu_custom_call.1} parent=11 // pred_check_branch
          %239 = sbr.rel (%p237) target = $region20
        $region19: #{tpu_custom_call.1} parent=11 // pred_region
          _
        $region20: #{tpu_custom_call.1} parent=11 // pred_fallthru
          _
        // Predicated region
        $region21: #{tpu_custom_call.1} parent=11 // pred_check
          %p240 = pneg %p193
        $region22: #{tpu_custom_call.1} parent=11 // pred_check_branch
          %242 = sbr.rel (%p240) target = $region24
        $region23: #{tpu_custom_call.1} parent=11 // pred_region
          _
        $region24: #{tpu_custom_call.1} parent=11 // pred_fallthru
          _
      $region12: #{tpu_custom_call.1} parent=5 // pred_fallthru
        _
      %p243 = scmp.lt.s32.totalorder %s22, 2
      // Predicated region
      $region25: #{tpu_custom_call.1} parent=5 // pred_check
        %p244 = pneg %p243
      $region26: #{tpu_custom_call.1} parent=5 // pred_check_branch
        %246 = sbr.rel (%p244) target = $region28
      $region27: #{tpu_custom_call.1} parent=5 // pred_region
        // Predicated region
        $region29: #{tpu_custom_call.1} parent=27 // pred_check
          %p247 = pneg %p60
        $region30: #{tpu_custom_call.1} parent=27 // pred_check_branch
          %249 = sbr.rel (%p247) target = $region32
        $region31: #{tpu_custom_call.1} parent=27 // pred_region
          %s250 = sand.u32 %s50, 1
          %s251 = scalar_lea.sflag [#allocation5], %s250
          %s252 = sand.u32 %s50, 1
          %s253 = smul.addr %s252, 8
          %s254 = scalar_lea.vmem [#allocation4], %s253
          %s255 = sadd.s32 %s29, %s30
          %p256 = scmp.lt.s32.totalorder %s255, 0
          %s257 = scalar_select %p256, %s255, 0
          %s259 = ssub.s32 128, 128
          %260 = vsyncadd %s251, %s259
          %s261 = smul.addr %s257, 128
          %s262 = scalar_lea.hbm %s0, %s261
          %s264 = sshll.u32 %s254, 4
          %s265 = int_to_ptr.vmem [resolvable:$true] %s264
          %267 = dma.hbm_to_vmem [thread:$0]  %s262, 128, %s265, %s251
        $region32: #{tpu_custom_call.1} parent=27 // pred_fallthru
          _
        // Predicated region
        $region33: #{tpu_custom_call.1} parent=27 // pred_check
          %p268 = pneg %p92
        $region34: #{tpu_custom_call.1} parent=27 // pred_check_branch
          %270 = sbr.rel (%p268) target = $region36
        $region35: #{tpu_custom_call.1} parent=27 // pred_region
          %s271 = sand.u32 %s22, 1
          %s272 = scalar_lea.sflag [#allocation8], %s271
          %s273 = sand.u32 %s82, 1
          %s274 = smul.addr %s273, 8
          %s275 = scalar_lea.vmem [#allocation7], %s274
          %s276 = sadd.s32 %s29, %s30
          %p277 = scmp.lt.s32.totalorder %s276, 0
          %s278 = scalar_select %p277, %s276, 0
          %s280 = ssub.s32 128, 128
          %281 = vsyncadd %s272, %s280
          %s282 = smul.addr %s278, 128
          %s283 = scalar_lea.hbm %s1, %s282
          %s285 = sshll.u32 %s275, 4
          %s286 = int_to_ptr.vmem [resolvable:$true] %s285
          %288 = dma.hbm_to_vmem [thread:$0]  %s283, 128, %s286, %s272
        $region36: #{tpu_custom_call.1} parent=27 // pred_fallthru
          _
        // Predicated region
        $region37: #{tpu_custom_call.1} parent=27 // pred_check
          %p289 = pneg %p124
        $region38: #{tpu_custom_call.1} parent=27 // pred_check_branch
          %291 = sbr.rel (%p289) target = $region40
        $region39: #{tpu_custom_call.1} parent=27 // pred_region
          %s292 = sand.u32 %s22, 1
          %s293 = scalar_lea.sflag [#allocation8], %s292
          %s294 = sand.u32 %s114, 1
          %s295 = smul.addr %s294, 8
          %s296 = scalar_lea.vmem [#allocation9], %s295
          %s297 = sadd.s32 %s29, %s30
          %p298 = scmp.lt.s32.totalorder %s297, 0
          %s299 = scalar_select %p298, %s297, 0
          %s301 = ssub.s32 128, 128
          %302 = vsyncadd %s293, %s301
          %s303 = smul.addr %s299, 128
          %s304 = scalar_lea.hbm %s2, %s303
          %s306 = sshll.u32 %s296, 4
          %s307 = int_to_ptr.vmem [resolvable:$true] %s306
          %309 = dma.hbm_to_vmem [thread:$0]  %s304, 128, %s307, %s293
        $region40: #{tpu_custom_call.1} parent=27 // pred_fallthru
          _
      $region28: #{tpu_custom_call.1} parent=5 // pred_fallthru
        _
      %p310 = scmp.le.s32.totalorder 1, %s22
      %p311 = scmp.lt.s32.totalorder %s22, 3
      %p312 = pnand %p310, %p311
      %p313 = pneg %p312
      // Predicated region
      $region41: #{tpu_custom_call.1} parent=5 // pred_check
        _
      $region42: #{tpu_custom_call.1} parent=5 // pred_check_branch
        %315 = sbr.rel (%p312) target = $region44
      $region43: #{tpu_custom_call.1} parent=5 // pred_region
        %s316 = ssub.s32 %s22, 1
        %s317 = sand.u32 %s53, 1
        %s318 = scalar_lea.sflag [#allocation5], %s317
        %s319 = sand.u32 %s53, 1
        %s320 = smul.addr %s319, 8
        %s321 = scalar_lea.vmem [#allocation4], %s320
        // Predicated region
        $region45: #{tpu_custom_call.1} parent=43 // pred_check
          %p322 = pneg %p66
        $region46: #{tpu_custom_call.1} parent=43 // pred_check_branch
          %324 = sbr.rel (%p322) target = $region48
        $region47: #{tpu_custom_call.1} parent=43 // pred_region
          %325 = dma.done %s318, 128
        $region48: #{tpu_custom_call.1} parent=43 // pred_fallthru
          _
        %s326 = sand.u32 %s27, 1
        %s327 = scalar_lea.sflag [#allocation8], %s326
        %s328 = sand.u32 %s85, 1
        %s329 = smul.addr %s328, 8
        %s330 = scalar_lea.vmem [#allocation7], %s329
        // Predicated region
        $region49: #{tpu_custom_call.1} parent=43 // pred_check
          %p331 = pneg %p98
        $region50: #{tpu_custom_call.1} parent=43 // pred_check_branch
          %333 = sbr.rel (%p331) target = $region52
        $region51: #{tpu_custom_call.1} parent=43 // pred_region
          %334 = dma.done %s327, 128
        $region52: #{tpu_custom_call.1} parent=43 // pred_fallthru
          _
        %s335 = sand.u32 %s27, 1
        %s336 = scalar_lea.sflag [#allocation8], %s335
        %s337 = sand.u32 %s117, 1
        %s338 = smul.addr %s337, 8
        %s339 = scalar_lea.vmem [#allocation9], %s338
        // Predicated region
        $region53: #{tpu_custom_call.1} parent=43 // pred_check
          %p340 = pneg %p130
        $region54: #{tpu_custom_call.1} parent=43 // pred_check_branch
          %342 = sbr.rel (%p340) target = $region56
        $region55: #{tpu_custom_call.1} parent=43 // pred_region
          %343 = dma.done %s336, 128
        $region56: #{tpu_custom_call.1} parent=43 // pred_fallthru
          _
        %s344 = sand.u32 %s53, 1
        %s345 = scalar_lea.sflag [#allocation5], %s344
        %s346 = sand.u32 %s53, 1
        %s347 = smul.addr %s346, 8
        %s348 = scalar_lea.vmem [#allocation4], %s347
        %p349 = pneg %p66
        %p350 = pneg %p63
        %s351 = sand.u32 %s27, 1
        %s352 = scalar_lea.sflag [#allocation8], %s351
        %s353 = sand.u32 %s85, 1
        %s354 = smul.addr %s353, 8
        %s355 = scalar_lea.vmem [#allocation7], %s354
        %p356 = pneg %p98
        %p357 = pneg %p95
        %s358 = sand.u32 %s27, 1
        %s359 = scalar_lea.sflag [#allocation8], %s358
        %s360 = sand.u32 %s117, 1
        %s361 = smul.addr %s360, 8
        %s362 = scalar_lea.vmem [#allocation9], %s361
        %p363 = pneg %p130
        %p364 = pneg %p127
        %p365 = pneg %p151
        %p366 = pneg %p148
        %p367 = pneg %p172
        %p368 = pneg %p169
        %p369 = pneg %p193
        %p370 = pneg %p190
        %p371 = pneg %p219
        %p372 = pneg %p216
        %s373 = sand.u32 %s206, 1
        %s374 = scalar_lea.sflag [#allocation6], %s373
        %s375 = sand.u32 %s206, 1
        %s376 = smul.addr %s375, 8
        %s377 = scalar_lea.vmem [#allocation10], %s376
        %s378 = sadd.s32 %s31, %s32
        %p379 = scmp.lt.s32.totalorder %s378, 0
        %s380 = scalar_select %p379, %s378, 0
        %s381 = sadd.s32 %s31, %s32
        %p382 = scmp.lt.s32.totalorder %s381, 0
        %s383 = scalar_select %p382, %s381, 0
        %s384 = sadd.s32 %s31, %s32
        %p385 = scmp.lt.s32.totalorder %s384, 0
        %s386 = scalar_select %p385, %s384, 0
        %p387 = scmp.eq.s32.totalorder %s32, 0
        // Predicated region
        $region57: #{tpu_custom_call.1} parent=43 // pred_check
          %p388 = pneg %p387
        $region58: #{tpu_custom_call.1} parent=43 // pred_check_branch
          %390 = sbr.rel (%p388) target = $region60
        $region59: #{tpu_custom_call.1} parent=43 // pred_region
          %vm391 = vcmask 7168
          %392 = vst.msk [vmem:[#allocation2] sm:$0xff] %vm391, 0.0
        $region60: #{tpu_custom_call.1} parent=43 // pred_fallthru
          _
        %v393 = vld [vmem:[%s321] sm:$0xff]
        %v394 = vld [vmem:[%s330] sm:$0xff]
        %v395 = vld [vmem:[%s339] sm:$0xff]
        %v396 = vld [vmem:[%s3] sm:$0x1]
        %v397 = vld [vmem:[%s4] sm:$0x1]
        %s398 = sld [smem:[#allocation3]]
        %v400 = vlaneseq
        %v401 = vshrl.u32 %v400, 7
        %v402 = vsub.s32 0, %v401
        %v403 = vrot.slane %v396, %v402
        %v405 = vmul.f32 %v393, %v403
        %vm406 = vcmask 261120
        %v407 = vsel %vm406, %v405, 0.0
        %408 = vadd.xlane.f32.xlu0 %v407
        %v409 = vpop.xlane.xlu0 %408
        %v411 = vlaneseq
        %v412 = vshrl.u32 %v411, 7
        %v413 = vsub.s32 0, %v412
        %v414 = vrot.slane %v397, %v413
        %v416 = vmul.f32 %v394, %v414
        %v417 = vsel %vm406, %v416, 0.0
        %418 = vadd.xlane.f32.xlu0 %v417
        %v419 = vpop.xlane.xlu0 %418
        %v420 = vmul.f32 %v395, %v414
        %v421 = vsel %vm406, %v420, 0.0
        %422 = vadd.xlane.f32.xlu0 %v421
        %v423 = vpop.xlane.xlu0 %422
        %v424 = vadd.f32 %v409, %v419
        %v425 = vstv %s398
        %v426 = vadd.f32 %v424, %v425
        %v427 = vxor.u32 %v426, 2147483648
        %v428 = vmul.f32 %v427, 1.442695
        %v429 = vpow.pop %v428
        %v430 = vadd.f32 %v429, 1.0
        %v431 = vrcp.pop %v430
        %v432 = vmul.f32 1.0, %v431
        %v433 = vadd.f32 %v409, %v423
        %v434 = vadd.f32 %v433, %v425
        %v435 = vxor.u32 %v434, 2147483648
        %v436 = vmul.f32 %v435, 1.442695
        %v437 = vpow.pop %v436
        %v438 = vadd.f32 %v437, 1.0
        %v439 = vrcp.pop %v438
        %v440 = vmul.f32 1.0, %v439
        %v441 = vsub.f32 %v440, %v432
        %v442 = vadd.f32 %v441, 0.25
        %v443 = vmax.f32 %v442, 0.0
        %s444 = sadd.s32 %s31, %s32
        %s445 = smul.u32 %s444, 8
        %v446 = vlaneseq
        %v447 = vshrl.u32 %v446, 7
        %v448 = vstv %s445
        %v449 = vadd.s32 %v448, %v447
        %v450 = vld [vmem:[#allocation2] sm:$0xff]
        %vm451 = vcmp.lt.s32.totalorder %v449, 8
        %v452 = vsel %vm451, %v443, 0.0
        %v453 = vadd.f32 %v450, %v452
        %vm454 = vcmask 7168
        %455 = vst.msk [vmem:[#allocation2] sm:$0xff] %vm454, %v453
        // Predicated region
        $region61: #{tpu_custom_call.1} parent=43 // pred_check
          %p456 = pneg %p387
        $region62: #{tpu_custom_call.1} parent=43 // pred_check_branch
          %458 = sbr.rel (%p456) target = $region64
        $region63: #{tpu_custom_call.1} parent=43 // pred_region
          %v459 = vld [vmem:[#allocation2] sm:$0xff]
          %v460 = vsel %vm454, %v459, 0.0
          %461 = vadd.xlane.f32.xlu0 %v460
          %v462 = vpop.xlane.xlu0 %461
          %v463 = vrot.slane %v462, 4
          %v464 = vadd.f32 %v462, %v463
          %v465 = vrot.slane %v464, 2
          %v466 = vadd.f32 %v464, %v465
          %v467 = vrot.slane %v466, 1
          %v468 = vadd.f32 %v466, %v467
          %s469 = vtos %v468
          %v470 = vlaneseq
          %v471 = vand.u32 %v470, 127
          %vm472 = vcmp.eq.s32.totalorder %v447, 0
          %vm473 = vcmp.eq.s32.totalorder %v471, 0
          %vm474 = vmand %vm472, %vm473
          %v475 = vstv %s469
          %v476 = vsel %vm474, %v475, 0.0
          %477 = vst [vmem:[%s377] sm:$0xff] %v476
        $region64: #{tpu_custom_call.1} parent=43 // pred_fallthru
          _
        %s478 = sand.u32 %s206, 1
        %s479 = scalar_lea.sflag [#allocation6], %s478
        %s480 = sand.u32 %s206, 1
        %s481 = smul.addr %s480, 8
        %s482 = scalar_lea.vmem [#allocation10], %s481
        // Predicated region
        $region65: #{tpu_custom_call.1} parent=43 // pred_check
          %p483 = pneg %p216
        $region66: #{tpu_custom_call.1} parent=43 // pred_check_branch
          %485 = sbr.rel (%p483) target = $region68
        $region67: #{tpu_custom_call.1} parent=43 // pred_region
          %s487 = ssub.s32 128, 128
          %488 = vsyncadd %s479, %s487
          %s489 = smul.addr %s31, 128
          %s490 = scalar_lea.hbm %s6, %s489
          %s492 = sshll.u32 %s482, 4
          %s493 = int_to_ptr.vmem [resolvable:$true] %s492
          %495 = dma.vmem_to_hbm [thread:$0]  %s493, 128, %s490, %s479
        $region68: #{tpu_custom_call.1} parent=43 // pred_fallthru
          _
      $region44: #{tpu_custom_call.1} parent=5 // pred_fallthru
        _
      %p496 = scmp.le.s32.totalorder 2, %s22
      // Predicated region
      $region69: #{tpu_custom_call.1} parent=5 // pred_check
        %p497 = pneg %p496
      $region70: #{tpu_custom_call.1} parent=5 // pred_check_branch
        %499 = sbr.rel (%p497) target = $region72
      $region71: #{tpu_custom_call.1} parent=5 // pred_region
        %s500 = ssub.s32 %s22, 2
        // Predicated region
        $region73: #{tpu_custom_call.1} parent=71 // pred_check
          %p501 = pneg %p222
        $region74: #{tpu_custom_call.1} parent=71 // pred_check_branch
          %503 = sbr.rel (%p501) target = $region76
        $region75: #{tpu_custom_call.1} parent=71 // pred_region
          %s504 = sand.u32 %s207, 1
          %s505 = scalar_lea.sflag [#allocation6], %s504
          %s506 = sand.u32 %s207, 1
          %s507 = smul.addr %s506, 8
          %s508 = scalar_lea.vmem [#allocation10], %s507
          %509 = dma.done %s505, 128
        $region76: #{tpu_custom_call.1} parent=71 // pred_fallthru
          _
      $region72: #{tpu_custom_call.1} parent=5 // pred_fallthru
        _
    $region6: #{tpu_custom_call.1} parent=1 // loop_footer
      %s26 = sadd.s32 1, %s22
    $region7: #{tpu_custom_call.1} parent=1 // loop_footer_branch
      %21 = sbr.rel target = $region3
    $region8: #{tpu_custom_call.1} parent=1 // loop_exit
      _
    %510 = vsyncpa [#allocation5], 1
    %s511 = scalar_lea.sflag [#allocation5], 1
    %512 = vsyncpa %s511, 1
    %513 = vsyncpa [#allocation8], 1
    %s514 = scalar_lea.sflag [#allocation8], 1
    %515 = vsyncpa %s514, 1
    %516 = vsyncpa [#allocation6], 1
    %s517 = scalar_lea.sflag [#allocation6], 1
    %518 = vsyncpa %s517, 1

</llo_original>
